<compile_context>
chip_gen: v5e
topology: v5e:2x2
jax: 0.10.0
libtpu: 0.0.40
codegen_flags: <defaults>
</compile_context>

<pallas_src>
import functools

import jax
import jax.numpy as jnp
from jax.experimental import pallas as pl
from jax.experimental.pallas import tpu as pltpu

IN_DIM = 16
HID = 32
N_BRANCH = 3
BRANCH_HID = 32
BRANCH_OUT = 8
OUT_DIM = N_BRANCH * BRANCH_OUT          # 24
H2_DIM = N_BRANCH * BRANCH_HID           # 96
BATCH = 8

# Packed parameter-slab layout (rows; all section starts sublane-aligned).
P_LANES = 128
W1_R0 = 0                                # 16 rows : w1 (16, 32)    in cols 0:32
B1_R0 = 16                               #  8 rows : b1             in row 16, cols 0:32
W2_R0 = 24                               # 32 rows : w2_all (32,96) in cols 0:96
B2_R0 = 56                               #  8 rows : b2_all         in row 56, cols 0:96
W3_R0 = 64                               # 96 rows : w3 block-diag (96, 24) in cols 0:24
B3_R0 = 160                              #  8 rows : b3_all         in row 160, cols 0:24
P_ROWS = 168

# Double-buffered working set at tb=8192: in ~1 MiB + out ~1.5 MiB + params 168 KiB
# + intermediates ~5 MiB  ->  well inside v5e's 16 MiB scoped-VMEM default (and
# v6e/v7x's 32 MiB), so no vmem_limit_bytes override is needed.
DEFAULT_TILE_B = 8192


def pfnn_kernel(x_ref, p_ref, o_ref):
    x = x_ref[...]                                                   # (tb, 16)

    # layer 1: shared Linear + tanh
    w1 = p_ref[W1_R0:W1_R0 + IN_DIM, :HID]                           # (16, 32)
    b1 = p_ref[B1_R0:B1_R0 + 1, :HID]                                # (1, 32)
    h1 = jnp.tanh(jnp.dot(x, w1, preferred_element_type=jnp.float32) + b1)

    # layer 2: all 3 branches fused into one (32, 96) matmul + one tanh
    w2 = p_ref[W2_R0:W2_R0 + HID, :H2_DIM]                           # (32, 96)
    b2 = p_ref[B2_R0:B2_R0 + 1, :H2_DIM]                             # (1, 96)
    h2 = jnp.tanh(jnp.dot(h1, w2, preferred_element_type=jnp.float32) + b2)

    # layer 3: block-diagonal (96, 24) matmul, identity activation, direct
    # (tb, 24) store (no padded lanes, no caller-side slice)
    w3 = p_ref[W3_R0:W3_R0 + H2_DIM, :OUT_DIM]                       # (96, 24)
    b3 = p_ref[B3_R0:B3_R0 + 1, :OUT_DIM]                            # (1, 24)
    y = jnp.dot(h2, w3, preferred_element_type=jnp.float32) + b3
    o_ref[...] = y.astype(o_ref.dtype)


def pack_params(w1, b1, w2, b2, w3, b3):
    """Pack all PFNN parameters into one (P_ROWS, 128) f32 slab (single DMA).

    Call this ONCE when weights are created/updated and reuse the slab across
    forward calls.
    """
    slab = jnp.zeros((P_ROWS, P_LANES), jnp.float32)
    slab = slab.at[W1_R0:W1_R0 + IN_DIM, :HID].set(w1)
    slab = slab.at[B1_R0, :HID].set(b1.reshape(HID))
    w2_all = jnp.concatenate([w2[j] for j in range(N_BRANCH)], axis=1)   # (32, 96)
    slab = slab.at[W2_R0:W2_R0 + HID, :H2_DIM].set(w2_all)
    slab = slab.at[B2_R0, :H2_DIM].set(b2.reshape(H2_DIM))
    for j in range(N_BRANCH):                                            # block-diagonal w3
        slab = slab.at[W3_R0 + j * BRANCH_HID:W3_R0 + (j + 1) * BRANCH_HID,
                       j * BRANCH_OUT:(j + 1) * BRANCH_OUT].set(w3[j])
    slab = slab.at[B3_R0, :OUT_DIM].set(b3.reshape(OUT_DIM))
    return slab


def _round_up(n, m):
    return ((n + m - 1) // m) * m


def _pick_tile(batch, tile_b):
    """Batch tile: as large as VMEM allows, but >=2 grid steps for big batches
    so v7x's 2 TensorCores both get work via the 'parallel' batch axis."""
    if batch <= 2048:
        return batch                       # single step; too small to split profitably
    return min(tile_b, _round_up(pl.cdiv(batch, 2), 8))


@functools.partial(jax.jit, static_argnames=("tile_b",))
def pfnn_forward_packed(x, param_slab, tile_b=DEFAULT_TILE_B):
    B = x.shape[0]
    tb = _pick_tile(B, tile_b)
    grid = (pl.cdiv(B, tb),)               # ragged last block handled by Pallas
                                           # (output writes bounded; rows independent)

    cost = pl.CostEstimate(
        flops=2 * B * (IN_DIM * HID + HID * H2_DIM + H2_DIM * OUT_DIM),
        transcendentals=B * (HID + H2_DIM),
        bytes_accessed=B * IN_DIM * 4 + P_ROWS * P_LANES * 4 + B * OUT_DIM * 4,
    )

    return pl.pallas_call(
        pfnn_kernel,
        out_shape=jax.ShapeDtypeStruct((B, OUT_DIM), jnp.float32),
        grid=grid,
        in_specs=[
            pl.BlockSpec((tb, IN_DIM), lambda i: (i, 0)),
            pl.BlockSpec((P_ROWS, P_LANES), lambda i: (0, 0)),
        ],
        out_specs=pl.BlockSpec((tb, OUT_DIM), lambda i: (i, 0)),
        compiler_params=pltpu.CompilerParams(
            dimension_semantics=("parallel",)),
        cost_estimate=cost,
    )(x, param_slab)


def pfnn_forward(x, w1, b1, w2, b2, w3, b3, tile_b=DEFAULT_TILE_B):
    """Convenience wrapper (packs params per call). Prefer packing once and
    calling pfnn_forward_packed directly when weights are static."""
    return pfnn_forward_packed(x, pack_params(w1, b1, w2, b2, w3, b3), tile_b=tile_b)


def xavier_normal(key, fan_in, fan_out):
    std = (2.0 / (fan_in + fan_out)) ** 0.5
    # stored as (in, out) so forward is y = x @ W + b (same math as nn.Linear)
    return std * jax.random.normal(key, (fan_in, fan_out), dtype=jnp.float32)


def make_params(key):
    ks = jax.random.split(key, 1 + 2 * N_BRANCH)
    w1 = xavier_normal(ks[0], IN_DIM, HID)
    b1 = jnp.zeros((1, HID), jnp.float32)
    w2 = jnp.stack([xavier_normal(ks[1 + j], HID, BRANCH_HID) for j in range(N_BRANCH)])
    b2 = jnp.zeros((N_BRANCH, 1, BRANCH_HID), jnp.float32)
    w3 = jnp.stack(
        [xavier_normal(ks[1 + N_BRANCH + j], BRANCH_HID, BRANCH_OUT) for j in range(N_BRANCH)]
    )
    b3 = jnp.zeros((N_BRANCH, 1, BRANCH_OUT), jnp.float32)
    return w1, b1, w2, b2, w3, b3


def pfnn_reference(x, w1, b1, w2, b2, w3, b3):
    h = jnp.tanh(x @ w1 + b1)
    outs = []
    for j in range(N_BRANCH):
        hj = jnp.tanh(h @ w2[j] + b2[j])
        outs.append(hj @ w3[j] + b3[j])
    return jnp.concatenate(outs, axis=1)


if __name__ == "__main__":
    key = jax.random.PRNGKey(0)
    kx, kp = jax.random.split(key)
    x = jax.random.normal(kx, (BATCH, IN_DIM), dtype=jnp.float32)
    params = make_params(kp)

    # Pack the parameter slab once (weights are static across calls), then run
    # the jitted forward.
    slab = pack_params(*params)
    out = pfnn_forward_packed(x, slab)
    out = jax.block_until_ready(out)

    ref = pfnn_reference(x, *params)
    assert out.shape == (BATCH, OUT_DIM)
    assert jnp.allclose(out, ref, atol=1e-5, rtol=1e-5)
    print("KERNEL_OK")
</pallas_src>

<mosaic_0001>
module attributes {stable_mosaic.version = 11 : i64} {
  func.func @pfnn_kernel(%arg0: i32, %arg1: memref<8x16xf32, #tpu.memory_space<vmem>>, %arg2: memref<168x128xf32, #tpu.memory_space<vmem>>, %arg3: memref<8x24xf32, #tpu.memory_space<vmem>>) attributes {dimension_semantics = [#tpu.dimension_semantics<parallel>], iteration_bounds = array<i64: 1>, scalar_prefetch = 0 : i64, scratch_operands = 0 : i64, tpu.core_type = #tpu.core_type<tc>, window_params = [{transform_indices = @transform_0, window_bounds = array<i64: 8, 16>}, {pipeline_mode = #tpu.pipeline_mode<synchronous>, transform_indices = @transform_1, window_bounds = array<i64: 168, 128>}, {transform_indices = @transform_2, window_bounds = array<i64: 8, 24>}]} {
    %c0 = arith.constant 0 : index
    %c0_0 = arith.constant 0 : index
    %0 = vector.load %arg1[%c0, %c0_0] : memref<8x16xf32, #tpu.memory_space<vmem>>, vector<8x16xf32>
    %c0_1 = arith.constant 0 : index
    %c0_2 = arith.constant 0 : index
    %1 = vector.load %arg2[%c0_1, %c0_2] : memref<168x128xf32, #tpu.memory_space<vmem>>, vector<16x32xf32>
    %c16 = arith.constant 16 : index
    %c0_3 = arith.constant 0 : index
    %2 = vector.load %arg2[%c16, %c0_3] : memref<168x128xf32, #tpu.memory_space<vmem>>, vector<1x32xf32>
    %cst = arith.constant dense<0.000000e+00> : vector<8x32xf32>
    %3 = tpu.matmul %0, %1, %cst {dimension_numbers = #tpu.dot_dimension_numbers<[1], [0], [0], [1], [0, 0, 1, 1], [], []>} : vector<8x16xf32>, vector<16x32xf32>, vector<8x32xf32> -> vector<8x32xf32>
    %4 = vector.broadcast %2 : vector<1x32xf32> to vector<8x32xf32>
    %5 = arith.addf %3, %4 : vector<8x32xf32>
    %6 = math.tanh %5 : vector<8x32xf32>
    %c24 = arith.constant 24 : index
    %c0_4 = arith.constant 0 : index
    %7 = vector.load %arg2[%c24, %c0_4] : memref<168x128xf32, #tpu.memory_space<vmem>>, vector<32x96xf32>
    %c56 = arith.constant 56 : index
    %c0_5 = arith.constant 0 : index
    %8 = vector.load %arg2[%c56, %c0_5] : memref<168x128xf32, #tpu.memory_space<vmem>>, vector<1x96xf32>
    %cst_6 = arith.constant dense<0.000000e+00> : vector<8x96xf32>
    %9 = tpu.matmul %6, %7, %cst_6 {dimension_numbers = #tpu.dot_dimension_numbers<[1], [0], [0], [1], [0, 0, 1, 1], [], []>} : vector<8x32xf32>, vector<32x96xf32>, vector<8x96xf32> -> vector<8x96xf32>
    %10 = vector.broadcast %8 : vector<1x96xf32> to vector<8x96xf32>
    %11 = arith.addf %9, %10 : vector<8x96xf32>
    %12 = math.tanh %11 : vector<8x96xf32>
    %c64 = arith.constant 64 : index
    %c0_7 = arith.constant 0 : index
    %13 = vector.load %arg2[%c64, %c0_7] : memref<168x128xf32, #tpu.memory_space<vmem>>, vector<96x24xf32>
    %c160 = arith.constant 160 : index
    %c0_8 = arith.constant 0 : index
    %14 = vector.load %arg2[%c160, %c0_8] : memref<168x128xf32, #tpu.memory_space<vmem>>, vector<1x24xf32>
    %cst_9 = arith.constant dense<0.000000e+00> : vector<8x24xf32>
    %15 = tpu.matmul %12, %13, %cst_9 {dimension_numbers = #tpu.dot_dimension_numbers<[1], [0], [0], [1], [0, 0, 1, 1], [], []>} : vector<8x96xf32>, vector<96x24xf32>, vector<8x24xf32> -> vector<8x24xf32>
    %16 = vector.broadcast %14 : vector<1x24xf32> to vector<8x24xf32>
    %17 = arith.addf %15, %16 : vector<8x24xf32>
    %c0_10 = arith.constant 0 : index
    %c0_11 = arith.constant 0 : index
    %18 = vector.load %arg3[%c0_10, %c0_11] : memref<8x24xf32, #tpu.memory_space<vmem>>, vector<8x24xf32>
    tpu.vector_store %arg3[%c0_10, %c0_11], %17 {strides = array<i32>} : memref<8x24xf32, #tpu.memory_space<vmem>>, vector<8x24xf32>,
    return
  }
  func.func @transform_0(%arg0: i32) -> (i32, i32) {
    %c0_i32 = arith.constant 0 : i32
    %c0_i32_0 = arith.constant 0 : i32
    return %arg0, %c0_i32 : i32, i32
  }
  func.func @transform_1(%arg0: i32) -> (i32, i32) {
    %c0_i32 = arith.constant 0 : i32
    %c0_i32_0 = arith.constant 0 : i32
    %c0_i32_1 = arith.constant 0 : i32
    return %c0_i32, %c0_i32_0 : i32, i32
  }
  func.func @transform_2(%arg0: i32) -> (i32, i32) {
    %c0_i32 = arith.constant 0 : i32
    %c0_i32_0 = arith.constant 0 : i32
    return %arg0, %c0_i32 : i32, i32
  }
}

</mosaic_0001>

<llo_original>
// kernel: pfnn_forward_packed.1
$region0: #{pfnn_forward_packed.1}
  #allocation0 [shape = 'u32[]', space=smem, size = 0x4, offset = 0x4, fixed_abs, tag = 'smem constant byte address 0x4 - core index']
  #allocation1 [shape = 'u32[72,128]{1,0:T(1,128)}', space=vmem, size = 0x9000, scoped, tag = 'internal scratch']
  %s0 = inlined_call_operand.hbm [shape: f32[8,16], index: 0, kind: input, shape index: {}]
  %s1 = inlined_call_operand.hbm [shape: f32[168,128], index: 1, kind: input, shape index: {}]
  %s2 = inlined_call_operand.hbm [shape: f32[8,24], index: 2, kind: output, shape index: {}]
  %s3 = sld [smem:[#allocation0]]
  $region26: #{pfnn_forward_packed.1} parent=0
    _
  %s5 = ssub.s32 1, %s3
  %s6 = scalar_select 0, %s5, %s3
  $region1: #{pfnn_forward_packed.1} parent=0
    #allocation2 [shape = 'u8[4096]{0}', space=vmem, size = 0x1000, scoped, tag = 'input window, operand 0, single buffered']
    #allocation3 [shape = 's32[1]{0}', space=sflag, size = 0x4, scoped, tag = 'scoped memory for pfnn_forward_packed.1']
    #allocation4 [shape = 's32[1]{0}', space=sflag, size = 0x4, scoped, tag = 'scoped memory for pfnn_forward_packed.1']
    #allocation5 [shape = 'u8[86016]{0}', space=vmem, size = 0x15000, scoped, tag = 'input window, operand 1, single buffered']
    #allocation6 [shape = 's32[1]{0}', space=sflag, size = 0x4, scoped, tag = 'scoped memory for pfnn_forward_packed.1']
    #allocation7 [shape = 'u8[4096]{0}', space=vmem, size = 0x1000, scoped, tag = 'output window, operand 0, single buffered']
    %7 = vsyncpa [#allocation3], 0
    %8 = vsyncpa [#allocation6], 0
    %9 = vsyncpa [#allocation4], 0
    // Predicated region
    $region2: #{pfnn_forward_packed.1} parent=1 // pred_check
      _
    $region3: #{pfnn_forward_packed.1} parent=1 // pred_check_branch
      %11 = sbr.rel (0) target = $region5
    $region4: #{pfnn_forward_packed.1} parent=1 // pred_region
      %13 = vsyncadd [#allocation3], 0
      %s15 = sshll.u32 %s0, 4
      %s16 = int_to_ptr.hbm [resolvable:$true] %s15
      %s17 = sshll.u32 [#allocation2], 4
      %s18 = int_to_ptr.vmem [resolvable:$true] %s17
      %20 = dma.hbm_to_vmem [thread:$0]  %s16, 128, %s18, [#allocation3]
    $region5: #{pfnn_forward_packed.1} parent=1 // pred_fallthru
      _
    // Predicated region
    $region6: #{pfnn_forward_packed.1} parent=1 // pred_check
      _
    $region7: #{pfnn_forward_packed.1} parent=1 // pred_check_branch
      %22 = sbr.rel (0) target = $region9
    $region8: #{pfnn_forward_packed.1} parent=1 // pred_region
      %24 = vsyncadd [#allocation6], 0
      %s25 = sshll.u32 %s1, 4
      %s26 = int_to_ptr.hbm [resolvable:$true] %s25
      %s27 = sshll.u32 [#allocation5], 4
      %s28 = int_to_ptr.vmem [resolvable:$true] %s27
      %33 = dma.hbm_to_vmem [thread:$0]  %s26, 2688, %s28, [#allocation6], 128, 128, 8
    $region9: #{pfnn_forward_packed.1} parent=1 // pred_fallthru
      _
    // Predicated region
    $region10: #{pfnn_forward_packed.1} parent=1 // pred_check
      _
    $region11: #{pfnn_forward_packed.1} parent=1 // pred_check_branch
      %35 = sbr.rel (0) target = $region13
    $region12: #{pfnn_forward_packed.1} parent=1 // pred_region
      %37 = dma.done [#allocation3], 128
    $region13: #{pfnn_forward_packed.1} parent=1 // pred_fallthru
      _
    // Predicated region
    $region14: #{pfnn_forward_packed.1} parent=1 // pred_check
      _
    $region15: #{pfnn_forward_packed.1} parent=1 // pred_check_branch
      %39 = sbr.rel (0) target = $region17
    $region16: #{pfnn_forward_packed.1} parent=1 // pred_region
      %41 = dma.done [#allocation6], 2688
    $region17: #{pfnn_forward_packed.1} parent=1 // pred_fallthru
      _
    %v42 = vld [vmem:[#allocation2] sm:$0xff]
    %v43 = vld [vmem:[#allocation5] sm:$0xff]
    %v44 = vld [vmem:[#allocation5 + $0x8] sm:$0xff]
    %v45 = vld [vmem:[#allocation5 + $0x10] sm:$0x1]
    %v46 = vperm.slane %v45, 0
    %vm47 = vcmask 130048
    %v49 = vsel %vm47, %v42, 0
    %51 = vmatpush.msra.mxu0 0.0
    %52 = vmatpush.msra.mxu0 0.0
    %53 = vmatpush.msra.mxu0 0.0
    %54 = vmatpush.msra.mxu0 0.0
    %55 = vmatpush.msra.mxu0 0.0
    %56 = vmatpush.msra.mxu0 0.0
    %57 = vmatpush.msra.mxu0 0.0
    %58 = vmatpush.msra.mxu0 0.0
    %59 = vmatpush.msra.mxu0 0.0
    %60 = vmatpush.msra.mxu0 0.0
    %61 = vmatpush.msra.mxu0 0.0
    %62 = vmatpush.msra.mxu0 0.0
    %63 = vmatpush.msra.mxu0 0.0
    %64 = vmatpush.msra.mxu0 0.0
    %65 = vmatpush.msra.mxu0 %v44
    %66 = vmatpush.msra.mxu0 %v43
    %67 = vmatmul.f32.gmra.mxu0 %v49
    %v68 = vpop.f32.mrf.mxu0
    %v69 = vadd.f32 %v46, %v68
    %70 = vdwg.mxu0
    %v71 = vtanh.pop %v69
    %v72 = vld [vmem:[#allocation5 + $0x18] sm:$0xff]
    %v73 = vld [vmem:[#allocation5 + $0x20] sm:$0xff]
    %v74 = vld [vmem:[#allocation5 + $0x28] sm:$0xff]
    %v75 = vld [vmem:[#allocation5 + $0x30] sm:$0xff]
    %v76 = vld [vmem:[#allocation5 + $0x38] sm:$0x1]
    %v77 = vperm.slane %v76, 0
    %vm78 = vcmask 261120
    %v80 = vsel %vm78, %v71, 0
    %82 = vmatpush.msra.mxu0 0.0
    %83 = vmatpush.msra.mxu0 0.0
    %84 = vmatpush.msra.mxu0 0.0
    %85 = vmatpush.msra.mxu0 0.0
    %86 = vmatpush.msra.mxu0 0.0
    %87 = vmatpush.msra.mxu0 0.0
    %88 = vmatpush.msra.mxu0 0.0
    %89 = vmatpush.msra.mxu0 0.0
    %90 = vmatpush.msra.mxu0 0.0
    %91 = vmatpush.msra.mxu0 0.0
    %92 = vmatpush.msra.mxu0 0.0
    %93 = vmatpush.msra.mxu0 0.0
    %94 = vmatpush.msra.mxu0 %v75
    %95 = vmatpush.msra.mxu0 %v74
    %96 = vmatpush.msra.mxu0 %v73
    %97 = vmatpush.msra.mxu0 %v72
    %98 = vmatmul.f32.gmra.mxu0 %v80
    %v99 = vpop.f32.mrf.mxu0
    %v100 = vadd.f32 %v77, %v99
    %101 = vdwg.mxu0
    %v102 = vtanh.pop %v100
    %v103 = vld [vmem:[#allocation5 + $0x40] sm:$0xff]
    %v104 = vld [vmem:[#allocation5 + $0x48] sm:$0xff]
    %v105 = vld [vmem:[#allocation5 + $0x50] sm:$0xff]
    %v106 = vld [vmem:[#allocation5 + $0x58] sm:$0xff]
    %v107 = vld [vmem:[#allocation5 + $0x60] sm:$0xff]
    %v108 = vld [vmem:[#allocation5 + $0x68] sm:$0xff]
    %v109 = vld [vmem:[#allocation5 + $0x70] sm:$0xff]
    %v110 = vld [vmem:[#allocation5 + $0x78] sm:$0xff]
    %v111 = vld [vmem:[#allocation5 + $0x80] sm:$0xff]
    %v112 = vld [vmem:[#allocation5 + $0x88] sm:$0xff]
    %v113 = vld [vmem:[#allocation5 + $0x90] sm:$0xff]
    %v114 = vld [vmem:[#allocation5 + $0x98] sm:$0xff]
    %v115 = vld [vmem:[#allocation5 + $0xa0] sm:$0x1]
    %v116 = vperm.slane %v115, 0
    %vm117 = vcmask 785408
    %v119 = vsel %vm117, %v102, 0
    %121 = vmatpush.msra.mxu0 0.0
    %122 = vmatpush.msra.mxu0 0.0
    %123 = vmatpush.msra.mxu0 0.0
    %124 = vmatpush.msra.mxu0 0.0
    %125 = vmatpush.msra.mxu0 %v114
    %126 = vmatpush.msra.mxu0 %v113
    %127 = vmatpush.msra.mxu0 %v112
    %128 = vmatpush.msra.mxu0 %v111
    %129 = vmatpush.msra.mxu0 %v110
    %130 = vmatpush.msra.mxu0 %v109
    %131 = vmatpush.msra.mxu0 %v108
    %132 = vmatpush.msra.mxu0 %v107
    %133 = vmatpush.msra.mxu0 %v106
    %134 = vmatpush.msra.mxu0 %v105
    %135 = vmatpush.msra.mxu0 %v104
    %136 = vmatpush.msra.mxu0 %v103
    %137 = vmatmul.f32.gmra.mxu0 %v119
    %v138 = vpop.f32.mrf.mxu0
    %v139 = vadd.f32 %v116, %v138
    %140 = vdwg.mxu0
    %vm141 = vcmask 195584
    %142 = vst.msk [vmem:[#allocation7] sm:$0xff] %vm141, %v139
    // Predicated region
    $region18: #{pfnn_forward_packed.1} parent=1 // pred_check
      _
    $region19: #{pfnn_forward_packed.1} parent=1 // pred_check_branch
      %144 = sbr.rel (0) target = $region21
    $region20: #{pfnn_forward_packed.1} parent=1 // pred_region
      %146 = vsyncadd [#allocation4], 0
      %s148 = sshll.u32 [#allocation7], 4
      %s149 = int_to_ptr.vmem [resolvable:$true] %s148
      %s150 = sshll.u32 %s2, 4
      %s151 = int_to_ptr.hbm [resolvable:$true] %s150
      %153 = dma.vmem_to_hbm [thread:$0]  %s149, 128, %s151, [#allocation4]
    $region21: #{pfnn_forward_packed.1} parent=1 // pred_fallthru
      _
    // Predicated region
    $region22: #{pfnn_forward_packed.1} parent=1 // pred_check
      _
    $region23: #{pfnn_forward_packed.1} parent=1 // pred_check_branch
      %155 = sbr.rel (0) target = $region25
    $region24: #{pfnn_forward_packed.1} parent=1 // pred_region
      %157 = dma.done [#allocation4], 128
    $region25: #{pfnn_forward_packed.1} parent=1 // pred_fallthru
      _
    %158 = vsyncpa [#allocation3], 1
    %159 = vsyncpa [#allocation6], 1
    %160 = vsyncpa [#allocation4], 1

</llo_original>
